<compile_context>
chip_gen: v6e
topology: v6e:2x2x1
jax: 0.10.0
libtpu: 0.0.40
codegen_flags: <defaults>
</compile_context>

<pallas_src>
import functools

import jax
import jax.numpy as jnp
import numpy as np
from jax.experimental import pallas as pl
from jax.experimental.pallas import tpu as pltpu

EPS = 1e-5
LANE = 128
_MIB = 1024 * 1024


def _round_up(x, m):
    return (x + m - 1) // m * m


def _vmem_capacity_bytes():
    try:
        return int(pltpu.get_tpu_info().vmem_capacity_bytes)
    except Exception:
        return 64 * _MIB          # conservative (v7x-sized) fallback


def _pick_batch_tile(batch, in_size, h_pad, o_pad, wbytes, budget):
    """Largest batch tile whose pass-2 VMEM footprint fits the budget."""
    # Constant-index operands are single-buffered (pl.Buffered(1)).
    fixed = (in_size * h_pad * wbytes + h_pad * o_pad * wbytes
             + 6 * h_pad * 4 + 2 * o_pad * 4)
    tile = 8
    for t in (2048, 1024, 512, 256, 128, 64, 32, 16, 8):
        per_tile = (2 * t * in_size * wbytes     # x tiles, double-buffered
                    + 2 * t * o_pad * 4          # y tiles, double-buffered
                    + t * h_pad * 4              # h (f32) in-kernel temporary
                    + t * h_pad * wbytes)        # relu/cast temporary
        if fixed + per_tile <= budget:
            tile = t
            break
    # Never tile coarser than the (8-row aligned) batch itself.
    tile = min(tile, _round_up(batch, 8))
    vmem_needed = fixed + (2 * tile * in_size * wbytes + 2 * tile * o_pad * 4
                           + tile * h_pad * (4 + wbytes))
    return tile, vmem_needed


def _mlp_forward_impl(x, w1p, gammap, betap, w2p, b2p, out_size, matmul_dtype):
    f32 = jnp.float32
    batch, in_size = x.shape
    h_pad = w1p.shape[1]
    o_pad = w2p.shape[1]
    wbytes = np.dtype(matmul_dtype).itemsize

    cap = _vmem_capacity_bytes()
    budget = max(cap * 3 // 4, 24 * _MIB)        # ~48 MiB v7x, ~96 MiB v5e/v6e
    tile_b, vmem_needed = _pick_batch_tile(batch, in_size, h_pad, o_pad,
                                           wbytes, budget)
    vmem_limit = int(min(budget, max(vmem_needed * 5 // 4, 32 * _MIB)))

    n_tiles = (batch + tile_b - 1) // tile_b
    padded_batch = n_tiles * tile_b
    need_mask = padded_batch != batch

    xk = x.astype(matmul_dtype)
    if need_mask:
        xk = jnp.pad(xk, ((0, padded_batch - batch), (0, 0)))

    # Leading "parallel" axis so pass-1 stats shard across both TensorCores on
    # v7x (a harmless size-1/2 sequential loop on single-TC chips).
    n_par = 2 if (n_tiles % 2 == 0 and n_tiles >= 2) else 1
    tiles_per_core = n_tiles // n_par
    inv_batch = 1.0 / batch

    # ---- Pass 1: per-channel sum / sum-of-squares of h = x @ W1 -------------
    def stats_kernel(x_ref, w1_ref, stats_ref):
        @pl.when(pl.program_id(1) == 0)
        def _():
            stats_ref[...] = jnp.zeros_like(stats_ref)

        h = jnp.dot(x_ref[...], w1_ref[...], preferred_element_type=f32)
        if need_mask:
            # Zero-padded tail rows already contribute 0 (no bias term), but
            # mask explicitly so the stats stay exact even if that changes.
            base = (pl.program_id(0) * tiles_per_core + pl.program_id(1)) * tile_b
            rows = base + jax.lax.broadcasted_iota(jnp.int32, (tile_b, 1), 0)
            h_m = jnp.where(rows < batch, h, 0.0)
        else:
            h_m = h
        s = jnp.sum(h_m, axis=0, keepdims=True)
        s2 = jnp.sum(h_m * h, axis=0, keepdims=True)
        stats_ref[...] += jnp.concatenate([s, s2], axis=0)[None]

    cost1 = pl.CostEstimate(
        flops=2 * padded_batch * in_size * h_pad + 3 * padded_batch * h_pad,
        transcendentals=0,
        bytes_accessed=(padded_batch * in_size * wbytes
                        + in_size * h_pad * wbytes + n_par * 2 * h_pad * 4))

    stats = pl.pallas_call(
        stats_kernel,
        out_shape=jax.ShapeDtypeStruct((n_par, 2, h_pad), f32),
        grid=(n_par, tiles_per_core),
        in_specs=[
            pl.BlockSpec((tile_b, in_size),
                         lambda p, i: (p * tiles_per_core + i, 0)),
            pl.BlockSpec((in_size, h_pad), lambda p, i: (0, 0),
                         pipeline_mode=pl.Buffered(1)),
        ],
        out_specs=pl.BlockSpec((1, 2, h_pad), lambda p, i: (p, 0, 0)),
        compiler_params=pltpu.CompilerParams(
            dimension_semantics=("parallel", "arbitrary"),
            vmem_limit_bytes=vmem_limit),
        cost_estimate=cost1,
    )(xk, w1p)

    # ---- Pass 2: y = relu((x @ W1) * scale + shift) @ W2 + b2 ---------------
    def fused_kernel(x_ref, w1_ref, stats_ref, gamma_ref, beta_ref,
                     w2_ref, b2_ref, o_ref):
        h = jnp.dot(x_ref[...], w1_ref[...], preferred_element_type=f32)
        st = jnp.sum(stats_ref[...], axis=0)                 # (2, h_pad)
        mean = st[0:1, :] * inv_batch
        var = jnp.maximum(st[1:2, :] * inv_batch - mean * mean, 0.0)
        scale = gamma_ref[...] * jax.lax.rsqrt(var + EPS)    # EUP slot (free-ish)
        shift = beta_ref[...] - mean * scale
        a = jnp.maximum(h * scale + shift, 0.0)              # single FMA + ReLU
        y = jnp.dot(a.astype(w2_ref.dtype), w2_ref[...],
                    preferred_element_type=f32)
        o_ref[...] = (y + b2_ref[...]).astype(o_ref.dtype)

    cost2 = pl.CostEstimate(
        flops=(2 * padded_batch * in_size * h_pad
               + 2 * padded_batch * h_pad * o_pad
               + 4 * padded_batch * h_pad),
        transcendentals=h_pad,
        bytes_accessed=(padded_batch * in_size * wbytes
                        + in_size * h_pad * wbytes + h_pad * o_pad * wbytes
                        + padded_batch * o_pad * 4
                        + (n_par * 2 + 2) * h_pad * 4 + o_pad * 4))

    const = functools.partial(pl.BlockSpec, pipeline_mode=pl.Buffered(1))
    y = pl.pallas_call(
        fused_kernel,
        out_shape=jax.ShapeDtypeStruct((padded_batch, o_pad), f32),
        grid=(n_tiles,),
        in_specs=[
            pl.BlockSpec((tile_b, in_size), lambda i: (i, 0)),
            const((in_size, h_pad), lambda i: (0, 0)),
            const((n_par, 2, h_pad), lambda i: (0, 0, 0)),
            const((1, h_pad), lambda i: (0, 0)),
            const((1, h_pad), lambda i: (0, 0)),
            const((h_pad, o_pad), lambda i: (0, 0)),
            const((1, o_pad), lambda i: (0, 0)),
        ],
        out_specs=pl.BlockSpec((tile_b, o_pad), lambda i: (i, 0)),
        compiler_params=pltpu.CompilerParams(
            dimension_semantics=("parallel",),
            vmem_limit_bytes=vmem_limit),
        cost_estimate=cost2,
    )(xk, w1p, stats, gammap, betap, w2p, b2p)

    return y[:batch, :out_size]


_forward_jit = jax.jit(_mlp_forward_impl, static_argnums=(6, 7))


def prepare_params(w1, b1, gamma, beta, w2, b2, *, matmul_dtype=jnp.bfloat16):
    """One-time padding/casting of parameters (hoisted out of the forward)."""
    del b1  # exactly cancelled by training-mode BatchNorm mean subtraction
    f32 = jnp.float32
    in_size, hidden = w1.shape
    out_size = w2.shape[1]
    h_pad = _round_up(hidden, LANE)
    o_pad = _round_up(out_size, LANE)
    w1p = jnp.zeros((in_size, h_pad), matmul_dtype).at[:, :hidden].set(
        w1.astype(matmul_dtype))
    w2p = jnp.zeros((h_pad, o_pad), matmul_dtype).at[:hidden, :out_size].set(
        w2.astype(matmul_dtype))
    gammap = jnp.zeros((1, h_pad), f32).at[0, :hidden].set(
        gamma.reshape(-1).astype(f32))
    betap = jnp.zeros((1, h_pad), f32).at[0, :hidden].set(
        beta.reshape(-1).astype(f32))
    b2p = jnp.zeros((1, o_pad), f32).at[0, :out_size].set(
        b2.reshape(-1).astype(f32))
    return (w1p, gammap, betap, w2p, b2p), out_size


def make_mlp(w1, b1, gamma, beta, w2, b2, *, matmul_dtype=jnp.bfloat16):
    """Returns a jitted forward(x); weights are padded/cast exactly once."""
    prepared, out_size = prepare_params(w1, b1, gamma, beta, w2, b2,
                                        matmul_dtype=matmul_dtype)

    def forward(x):
        return _forward_jit(x, *prepared, out_size, matmul_dtype)

    return forward


def init_params(key, input_size, hidden_size, output_size):
    """Deterministic init mimicking PyTorch Linear default U[-1/sqrt(fan_in), ..]."""
    k1, k2, k3, k4 = jax.random.split(key, 4)
    lim1 = 1.0 / jnp.sqrt(input_size)
    lim2 = 1.0 / jnp.sqrt(hidden_size)
    # Stored pre-transposed: (in, out)
    w1 = jax.random.uniform(k1, (input_size, hidden_size), jnp.float32, -lim1, lim1)
    b1 = jax.random.uniform(k2, (1, hidden_size), jnp.float32, -lim1, lim1)
    w2 = jax.random.uniform(k3, (hidden_size, output_size), jnp.float32, -lim2, lim2)
    b2 = jax.random.uniform(k4, (1, output_size), jnp.float32, -lim2, lim2)
    gamma = jnp.ones((1, hidden_size), jnp.float32)   # BatchNorm1d weight
    beta = jnp.zeros((1, hidden_size), jnp.float32)   # BatchNorm1d bias
    return w1, b1, gamma, beta, w2, b2


def mlp_reference_np(x, w1, b1, gamma, beta, w2, b2):
    """Gold reference in float64 on the host (training-mode BatchNorm1d)."""
    x, w1, b1, gamma, beta, w2, b2 = (np.asarray(a, np.float64)
                                      for a in (x, w1, b1, gamma, beta, w2, b2))
    h = x @ w1 + b1
    mean = h.mean(axis=0, keepdims=True)
    var = ((h - mean) ** 2).mean(axis=0, keepdims=True)
    h = (h - mean) / np.sqrt(var + EPS) * gamma + beta
    h = np.maximum(h, 0.0)
    return h @ w2 + b2


if __name__ == "__main__":
    input_size, hidden_size, output_size = 16, 32, 8
    batch = 32

    key = jax.random.PRNGKey(0)
    kx, kx2, kp = jax.random.split(key, 3)
    x = jax.random.normal(kx, (batch, input_size), jnp.float32)
    params = init_params(kp, input_size, hidden_size, output_size)
    ref = mlp_reference_np(x, *params)

    # f32 MXU path (validation; tight tolerance vs the float64 reference).
    fwd_f32 = make_mlp(*params, matmul_dtype=jnp.float32)
    out_f32 = jax.block_until_ready(fwd_f32(x))
    assert out_f32.shape == (batch, output_size)
    assert np.allclose(np.asarray(out_f32), ref, atol=5e-3, rtol=5e-3), \
        "f32 path mismatch vs reference"

    # Default bf16 MXU path (f32 accumulation, f32 BN/ReLU) — looser tolerance.
    fwd_bf16 = make_mlp(*params)
    out_bf16 = jax.block_until_ready(fwd_bf16(x))
    assert np.allclose(np.asarray(out_bf16), ref, atol=1.5e-1, rtol=1.5e-1), \
        "bf16 path mismatch vs reference"

    # Non-divisible batch (zero-padded, stats-masked tail tile) path.
    x_odd = jax.random.normal(kx2, (10, input_size), jnp.float32)
    ref_odd = mlp_reference_np(x_odd, *params)
    out_odd = jax.block_until_ready(fwd_f32(x_odd))
    assert out_odd.shape == (10, output_size)
    assert np.allclose(np.asarray(out_odd), ref_odd, atol=5e-3, rtol=5e-3), \
        "masked-tail path mismatch vs reference"

    print("KERNEL_OK")
</pallas_src>

<mosaic_0001>
module attributes {stable_mosaic.version = 11 : i64} {
  func.func @stats_kernel(%arg0: i32, %arg1: i32, %arg2: memref<32x16xf32, #tpu.memory_space<vmem>>, %arg3: memref<16x128xf32, #tpu.memory_space<vmem>>, %arg4: memref<1x2x128xf32, #tpu.memory_space<vmem>>) attributes {dimension_semantics = [#tpu.dimension_semantics<parallel>, #tpu.dimension_semantics<arbitrary>], iteration_bounds = array<i64: 1, 1>, scalar_prefetch = 0 : i64, scratch_operands = 0 : i64, tpu.core_type = #tpu.core_type<tc>, window_params = [{transform_indices = @transform_0, window_bounds = array<i64: 32, 16>}, {pipeline_mode = #tpu.pipeline_mode<synchronous>, transform_indices = @transform_1, window_bounds = array<i64: 16, 128>}, {transform_indices = @transform_2, window_bounds = array<i64: 1, 2, 128>}]} {
    %c0_i32 = arith.constant 0 : i32
    %0 = arith.cmpi eq, %arg1, %c0_i32 : i32
    %1 = arith.extui %0 : i1 to i32
    %c0_i32_0 = arith.constant 0 : i32
    %2 = arith.cmpi ne, %1, %c0_i32_0 : i32
    scf.if %2 {
      %cst_12 = arith.constant 0.000000e+00 : f32
      %16 = vector.broadcast %cst_12 : f32 to vector<1x2x128xf32>
      %c0_13 = arith.constant 0 : index
      %c0_14 = arith.constant 0 : index
      %c0_15 = arith.constant 0 : index
      %17 = vector.load %arg4[%c0_13, %c0_14, %c0_15] : memref<1x2x128xf32, #tpu.memory_space<vmem>>, vector<1x2x128xf32>
      tpu.vector_store %arg4[%c0_13, %c0_14, %c0_15], %16 {strides = array<i32>} : memref<1x2x128xf32, #tpu.memory_space<vmem>>, vector<1x2x128xf32>,
    } else {
    }
    %c0 = arith.constant 0 : index
    %c0_1 = arith.constant 0 : index
    %3 = vector.load %arg2[%c0, %c0_1] : memref<32x16xf32, #tpu.memory_space<vmem>>, vector<32x16xf32>
    %c0_2 = arith.constant 0 : index
    %c0_3 = arith.constant 0 : index
    %4 = vector.load %arg3[%c0_2, %c0_3] : memref<16x128xf32, #tpu.memory_space<vmem>>, vector<16x128xf32>
    %cst = arith.constant dense<0.000000e+00> : vector<32x128xf32>
    %5 = tpu.matmul %3, %4, %cst {dimension_numbers = #tpu.dot_dimension_numbers<[1], [0], [0], [1], [0, 0, 1, 1], [], []>} : vector<32x16xf32>, vector<16x128xf32>, vector<32x128xf32> -> vector<32x128xf32>
    %cst_4 = arith.constant dense<0.000000e+00> : vector<128xf32>
    %6 = vector.multi_reduction <add>, %5, %cst_4 [0] : vector<32x128xf32> to vector<128xf32>
    %7 = vector.shape_cast %6 : vector<128xf32> to vector<1x128xf32>
    %8 = arith.mulf %5, %5 : vector<32x128xf32>
    %cst_5 = arith.constant dense<0.000000e+00> : vector<128xf32>
    %9 = vector.multi_reduction <add>, %8, %cst_5 [0] : vector<32x128xf32> to vector<128xf32>
    %10 = vector.shape_cast %9 : vector<128xf32> to vector<1x128xf32>
    %c0_6 = arith.constant 0 : index
    %c0_7 = arith.constant 0 : index
    %c0_8 = arith.constant 0 : index
    %11 = vector.load %arg4[%c0_6, %c0_7, %c0_8] : memref<1x2x128xf32, #tpu.memory_space<vmem>>, vector<1x2x128xf32>
    %12 = tpu.concatenate %7, %10 in 0 : vector<1x128xf32>, vector<1x128xf32> -> vector<2x128xf32>
    %13 = vector.shape_cast %12 : vector<2x128xf32> to vector<1x2x128xf32>
    %14 = arith.addf %11, %13 : vector<1x2x128xf32>
    %c0_9 = arith.constant 0 : index
    %c0_10 = arith.constant 0 : index
    %c0_11 = arith.constant 0 : index
    %15 = vector.load %arg4[%c0_9, %c0_10, %c0_11] : memref<1x2x128xf32, #tpu.memory_space<vmem>>, vector<1x2x128xf32>
    tpu.vector_store %arg4[%c0_9, %c0_10, %c0_11], %14 {strides = array<i32>} : memref<1x2x128xf32, #tpu.memory_space<vmem>>, vector<1x2x128xf32>,
    return
  }
  func.func @transform_0(%arg0: i32, %arg1: i32) -> (i32, i32) {
    %c1_i32 = arith.constant 1 : i32
    %0 = arith.muli %arg0, %c1_i32 : i32
    %1 = arith.addi %0, %arg1 : i32
    %c0_i32 = arith.constant 0 : i32
    %c0_i32_0 = arith.constant 0 : i32
    return %1, %c0_i32 : i32, i32
  }
  func.func @transform_1(%arg0: i32, %arg1: i32) -> (i32, i32) {
    %c0_i32 = arith.constant 0 : i32
    %c0_i32_0 = arith.constant 0 : i32
    %c0_i32_1 = arith.constant 0 : i32
    return %c0_i32, %c0_i32_0 : i32, i32
  }
  func.func @transform_2(%arg0: i32, %arg1: i32) -> (i32, i32, i32) {
    %c0_i32 = arith.constant 0 : i32
    %c0_i32_0 = arith.constant 0 : i32
    %c0_i32_1 = arith.constant 0 : i32
    return %arg0, %c0_i32, %c0_i32_0 : i32, i32, i32
  }
}

module attributes {stable_mosaic.version = 11 : i64} {
  func.func @fused_kernel(%arg0: i32, %arg1: memref<32x16xf32, #tpu.memory_space<vmem>>, %arg2: memref<16x128xf32, #tpu.memory_space<vmem>>, %arg3: memref<1x2x128xf32, #tpu.memory_space<vmem>>, %arg4: memref<1x128xf32, #tpu.memory_space<vmem>>, %arg5: memref<1x128xf32, #tpu.memory_space<vmem>>, %arg6: memref<128x128xf32, #tpu.memory_space<vmem>>, %arg7: memref<1x128xf32, #tpu.memory_space<vmem>>, %arg8: memref<32x128xf32, #tpu.memory_space<vmem>>) attributes {dimension_semantics = [#tpu.dimension_semantics<parallel>], iteration_bounds = array<i64: 1>, scalar_prefetch = 0 : i64, scratch_operands = 0 : i64, tpu.core_type = #tpu.core_type<tc>, window_params = [{transform_indices = @transform_0, window_bounds = array<i64: 32, 16>}, {pipeline_mode = #tpu.pipeline_mode<synchronous>, transform_indices = @transform_1, window_bounds = array<i64: 16, 128>}, {pipeline_mode = #tpu.pipeline_mode<synchronous>, transform_indices = @transform_2, window_bounds = array<i64: 1, 2, 128>}, {pipeline_mode = #tpu.pipeline_mode<synchronous>, transform_indices = @transform_3, window_bounds = array<i64: 1, 128>}, {pipeline_mode = #tpu.pipeline_mode<synchronous>, transform_indices = @transform_4, window_bounds = array<i64: 1, 128>}, {pipeline_mode = #tpu.pipeline_mode<synchronous>, transform_indices = @transform_5, window_bounds = array<i64: 128, 128>}, {pipeline_mode = #tpu.pipeline_mode<synchronous>, transform_indices = @transform_6, window_bounds = array<i64: 1, 128>}, {transform_indices = @transform_7, window_bounds = array<i64: 32, 128>}]} {
    %c0 = arith.constant 0 : index
    %c0_0 = arith.constant 0 : index
    %0 = vector.load %arg1[%c0, %c0_0] : memref<32x16xf32, #tpu.memory_space<vmem>>, vector<32x16xf32>
    %c0_1 = arith.constant 0 : index
    %c0_2 = arith.constant 0 : index
    %1 = vector.load %arg2[%c0_1, %c0_2] : memref<16x128xf32, #tpu.memory_space<vmem>>, vector<16x128xf32>
    %cst = arith.constant dense<0.000000e+00> : vector<32x128xf32>
    %2 = tpu.matmul %0, %1, %cst {dimension_numbers = #tpu.dot_dimension_numbers<[1], [0], [0], [1], [0, 0, 1, 1], [], []>} : vector<32x16xf32>, vector<16x128xf32>, vector<32x128xf32> -> vector<32x128xf32>
    %c0_3 = arith.constant 0 : index
    %c0_4 = arith.constant 0 : index
    %c0_5 = arith.constant 0 : index
    %3 = vector.load %arg3[%c0_3, %c0_4, %c0_5] : memref<1x2x128xf32, #tpu.memory_space<vmem>>, vector<1x2x128xf32>
    %cst_6 = arith.constant dense<0.000000e+00> : vector<2x128xf32>
    %4 = vector.multi_reduction <add>, %3, %cst_6 [0] : vector<1x2x128xf32> to vector<2x128xf32>
    %5 = vector.extract_strided_slice %4 {offsets = [0, 0], sizes = [1, 128], strides = [1, 1]} : vector<2x128xf32> to vector<1x128xf32>
    %cst_7 = arith.constant 3.125000e-02 : f32
    %6 = vector.broadcast %cst_7 : f32 to vector<1x128xf32>
    %7 = arith.mulf %5, %6 : vector<1x128xf32>
    %8 = vector.extract_strided_slice %4 {offsets = [1, 0], sizes = [1, 128], strides = [1, 1]} : vector<2x128xf32> to vector<1x128xf32>
    %cst_8 = arith.constant 3.125000e-02 : f32
    %9 = vector.broadcast %cst_8 : f32 to vector<1x128xf32>
    %10 = arith.mulf %8, %9 : vector<1x128xf32>
    %11 = arith.mulf %7, %7 : vector<1x128xf32>
    %12 = arith.subf %10, %11 : vector<1x128xf32>
    %cst_9 = arith.constant 0.000000e+00 : f32
    %13 = vector.broadcast %cst_9 : f32 to vector<1x128xf32>
    %14 = arith.maximumf %12, %13 : vector<1x128xf32>
    %c0_10 = arith.constant 0 : index
    %c0_11 = arith.constant 0 : index
    %15 = vector.load %arg4[%c0_10, %c0_11] : memref<1x128xf32, #tpu.memory_space<vmem>>, vector<1x128xf32>
    %cst_12 = arith.constant 9.99999974E-6 : f32
    %16 = vector.broadcast %cst_12 : f32 to vector<1x128xf32>
    %17 = arith.addf %14, %16 : vector<1x128xf32>
    %18 = math.rsqrt %17 : vector<1x128xf32>
    %19 = arith.mulf %15, %18 : vector<1x128xf32>
    %c0_13 = arith.constant 0 : index
    %c0_14 = arith.constant 0 : index
    %20 = vector.load %arg5[%c0_13, %c0_14] : memref<1x128xf32, #tpu.memory_space<vmem>>, vector<1x128xf32>
    %21 = arith.mulf %7, %19 : vector<1x128xf32>
    %22 = arith.subf %20, %21 : vector<1x128xf32>
    %23 = vector.broadcast %19 : vector<1x128xf32> to vector<32x128xf32>
    %24 = arith.mulf %2, %23 : vector<32x128xf32>
    %25 = vector.broadcast %22 : vector<1x128xf32> to vector<32x128xf32>
    %26 = arith.addf %24, %25 : vector<32x128xf32>
    %cst_15 = arith.constant 0.000000e+00 : f32
    %27 = vector.broadcast %cst_15 : f32 to vector<32x128xf32>
    %28 = arith.maximumf %26, %27 : vector<32x128xf32>
    %c0_16 = arith.constant 0 : index
    %c0_17 = arith.constant 0 : index
    %29 = vector.load %arg6[%c0_16, %c0_17] : memref<128x128xf32, #tpu.memory_space<vmem>>, vector<128x128xf32>
    %cst_18 = arith.constant dense<0.000000e+00> : vector<32x128xf32>
    %30 = tpu.matmul %28, %29, %cst_18 {dimension_numbers = #tpu.dot_dimension_numbers<[1], [0], [0], [1], [0, 0, 1, 1], [], []>} : vector<32x128xf32>, vector<128x128xf32>, vector<32x128xf32> -> vector<32x128xf32>
    %c0_19 = arith.constant 0 : index
    %c0_20 = arith.constant 0 : index
    %31 = vector.load %arg7[%c0_19, %c0_20] : memref<1x128xf32, #tpu.memory_space<vmem>>, vector<1x128xf32>
    %32 = vector.broadcast %31 : vector<1x128xf32> to vector<32x128xf32>
    %33 = arith.addf %30, %32 : vector<32x128xf32>
    %c0_21 = arith.constant 0 : index
    %c0_22 = arith.constant 0 : index
    %34 = vector.load %arg8[%c0_21, %c0_22] : memref<32x128xf32, #tpu.memory_space<vmem>>, vector<32x128xf32>
    tpu.vector_store %arg8[%c0_21, %c0_22], %33 {strides = array<i32>} : memref<32x128xf32, #tpu.memory_space<vmem>>, vector<32x128xf32>,
    return
  }
  func.func @transform_0(%arg0: i32) -> (i32, i32) {
    %c0_i32 = arith.constant 0 : i32
    %c0_i32_0 = arith.constant 0 : i32
    return %arg0, %c0_i32 : i32, i32
  }
  func.func @transform_1(%arg0: i32) -> (i32, i32) {
    %c0_i32 = arith.constant 0 : i32
    %c0_i32_0 = arith.constant 0 : i32
    %c0_i32_1 = arith.constant 0 : i32
    return %c0_i32, %c0_i32_0 : i32, i32
  }
  func.func @transform_2(%arg0: i32) -> (i32, i32, i32) {
    %c0_i32 = arith.constant 0 : i32
    %c0_i32_0 = arith.constant 0 : i32
    %c0_i32_1 = arith.constant 0 : i32
    %c0_i32_2 = arith.constant 0 : i32
    return %c0_i32, %c0_i32_0, %c0_i32_1 : i32, i32, i32
  }
  func.func @transform_3(%arg0: i32) -> (i32, i32) {
    %c0_i32 = arith.constant 0 : i32
    %c0_i32_0 = arith.constant 0 : i32
    %c0_i32_1 = arith.constant 0 : i32
    return %c0_i32, %c0_i32_0 : i32, i32
  }
  func.func @transform_4(%arg0: i32) -> (i32, i32) {
    %c0_i32 = arith.constant 0 : i32
    %c0_i32_0 = arith.constant 0 : i32
    %c0_i32_1 = arith.constant 0 : i32
    return %c0_i32, %c0_i32_0 : i32, i32
  }
  func.func @transform_5(%arg0: i32) -> (i32, i32) {
    %c0_i32 = arith.constant 0 : i32
    %c0_i32_0 = arith.constant 0 : i32
    %c0_i32_1 = arith.constant 0 : i32
    return %c0_i32, %c0_i32_0 : i32, i32
  }
  func.func @transform_6(%arg0: i32) -> (i32, i32) {
    %c0_i32 = arith.constant 0 : i32
    %c0_i32_0 = arith.constant 0 : i32
    %c0_i32_1 = arith.constant 0 : i32
    return %c0_i32, %c0_i32_0 : i32, i32
  }
  func.func @transform_7(%arg0: i32) -> (i32, i32) {
    %c0_i32 = arith.constant 0 : i32
    %c0_i32_0 = arith.constant 0 : i32
    return %arg0, %c0_i32 : i32, i32
  }
}

</mosaic_0001>

<llo_original>
// kernel: _mlp_forward_impl.2
$region0: #{_mlp_forward_impl.2}
  #allocation0 [shape = 'u32[]', space=smem, size = 0x4, offset = 0x4, fixed_abs, tag = 'smem constant byte address 0x4 - core index']
  #allocation1 [shape = 'u32[144,128]{1,0:T(1,128)}', space=vmem, size = 0x12000, scoped, tag = 'internal scratch']
  %s0 = inlined_call_operand.vmem [shape: f32[32,16], index: 0, kind: input, shape index: {}]
  %s1 = inlined_call_operand.vmem [shape: f32[16,128], index: 1, kind: input, shape index: {}]
  %s2 = inlined_call_operand.vmem [shape: f32[1,2,128], index: 2, kind: output, shape index: {}]
  %s3 = sld [smem:[#allocation0]]
  $region22: #{_mlp_forward_impl.2} parent=0
    _
  %s5 = ssub.s32 1, %s3
  %s6 = scalar_select 0, %s5, %s3
  // Predicated region
  $region2: #{_mlp_forward_impl.2} parent=0 // pred_check
    _
  $region3: #{_mlp_forward_impl.2} parent=0 // pred_check_branch
    %8 = sbr.rel (0) target = $region5
  $region4: #{_mlp_forward_impl.2} parent=0 // pred_region
    %s9 = sadd.s32 0, 0
    %s10 = smul.u32 4, %s9
    %p11 = scmp.lt.s32.totalorder %s10, 3
    %s12 = scalar_select %p11, %s10, 3
    %s13 = smul.addr %s12, 8
    %s14 = scalar_lea.vmem %s0, %s13
    %s15 = sadd.s32 0, 0
    %s16 = smul.u32 4, %s15
  $region5: #{_mlp_forward_impl.2} parent=0 // pred_fallthru
    _
  // Predicated region
  $region6: #{_mlp_forward_impl.2} parent=0 // pred_check
    _
  $region7: #{_mlp_forward_impl.2} parent=0 // pred_check_branch
    %18 = sbr.rel (0) target = $region9
  $region8: #{_mlp_forward_impl.2} parent=0 // pred_region
    _
  $region9: #{_mlp_forward_impl.2} parent=0 // pred_fallthru
    _
  %s19 = sadd.s32 0, 0
  %s20 = smul.u32 4, %s19
  %p21 = scmp.lt.s32.totalorder %s20, 3
  %s22 = scalar_select %p21, %s20, 3
  %s23 = smul.addr %s22, 8
  %s24 = scalar_lea.vmem %s0, %s23
  %s25 = sadd.s32 0, 0
  %s26 = smul.u32 4, %s25
  %p27 = scmp.lt.s32.totalorder %s26, 3
  %s28 = scalar_select %p27, %s26, 3
  %s29 = smul.addr %s28, 8
  %s30 = scalar_lea.vmem %s0, %s29
  %s31 = sadd.s32 0, 0
  %s32 = smul.u32 4, %s31
  %p33 = scmp.eq.s32.totalorder 0, 0
  // Predicated region
  $region10: #{_mlp_forward_impl.2} parent=0 // pred_check
    %p34 = pneg %p33
  $region11: #{_mlp_forward_impl.2} parent=0 // pred_check_branch
    %36 = sbr.rel (%p34) target = $region13
  $region12: #{_mlp_forward_impl.2} parent=0 // pred_region
    %37 = vst [vmem:[%s2] sm:$0x3] 0.0
  $region13: #{_mlp_forward_impl.2} parent=0 // pred_fallthru
    _
  %v38 = vld [vmem:[%s30] sm:$0xff]
  %v39 = vld [vmem:[%s30 + $0x8] sm:$0xff]
  %v40 = vld [vmem:[%s30 + $0x10] sm:$0xff]
  %v41 = vld [vmem:[%s30 + $0x18] sm:$0xff]
  %v42 = vld [vmem:[%s1] sm:$0xff]
  %v43 = vld [vmem:[%s1 + $0x8] sm:$0xff]
  %vm44 = vcmask 130048
  %v46 = vsel %vm44, %v38, 0
  %v49 = vsel %vm44, %v39, 0
  %v52 = vsel %vm44, %v40, 0
  %v55 = vsel %vm44, %v41, 0
  %57 = vmatprep.subr.mxu0 0.0
  %58 = vmatpush1.msra.mxu0 0.0
  %59 = vmatprep.subr.mxu0 0.0
  %60 = vmatpush1.msra.mxu0 0.0
  %61 = vmatprep.subr.mxu0 0.0
  %62 = vmatpush1.msra.mxu0 0.0
  %63 = vmatprep.subr.mxu0 0.0
  %64 = vmatpush1.msra.mxu0 0.0
  %65 = vmatprep.subr.mxu0 0.0
  %66 = vmatpush1.msra.mxu0 0.0
  %67 = vmatprep.subr.mxu0 0.0
  %68 = vmatpush1.msra.mxu0 0.0
  %69 = vmatprep.subr.mxu0 0.0
  %70 = vmatpush1.msra.mxu0 0.0
  %71 = vmatprep.subr.mxu0 0.0
  %72 = vmatpush1.msra.mxu0 0.0
  %73 = vmatprep.subr.mxu0 0.0
  %74 = vmatpush1.msra.mxu0 0.0
  %75 = vmatprep.subr.mxu0 0.0
  %76 = vmatpush1.msra.mxu0 0.0
  %77 = vmatprep.subr.mxu0 0.0
  %78 = vmatpush1.msra.mxu0 0.0
  %79 = vmatprep.subr.mxu0 0.0
  %80 = vmatpush1.msra.mxu0 0.0
  %81 = vmatprep.subr.mxu0 0.0
  %82 = vmatpush1.msra.mxu0 0.0
  %83 = vmatprep.subr.mxu0 0.0
  %84 = vmatpush1.msra.mxu0 0.0
  %85 = vmatprep.subr.mxu0 0.0
  %86 = vmatpush1.msra.mxu0 %v43
  %87 = vmatprep.subr.mxu0 0.0
  %88 = vmatpush1.msra.mxu0 %v42
  %89 = vmatprep.subr.mxu0 0.0
  %90 = vmatpush2.msra.mxu0 0.0
  %91 = vmatprep.subr.mxu0 0.0
  %92 = vmatpush2.msra.mxu0 0.0
  %93 = vmatprep.subr.mxu0 0.0
  %94 = vmatpush2.msra.mxu0 0.0
  %95 = vmatprep.subr.mxu0 0.0
  %96 = vmatpush2.msra.mxu0 0.0
  %97 = vmatprep.subr.mxu0 0.0
  %98 = vmatpush2.msra.mxu0 0.0
  %99 = vmatprep.subr.mxu0 0.0
  %100 = vmatpush2.msra.mxu0 0.0
  %101 = vmatprep.subr.mxu0 0.0
  %102 = vmatpush2.msra.mxu0 0.0
  %103 = vmatprep.subr.mxu0 0.0
  %104 = vmatpush2.msra.mxu0 0.0
  %105 = vmatprep.subr.mxu0 0.0
  %106 = vmatpush2.msra.mxu0 0.0
  %107 = vmatprep.subr.mxu0 0.0
  %108 = vmatpush2.msra.mxu0 0.0
  %109 = vmatprep.subr.mxu0 0.0
  %110 = vmatpush2.msra.mxu0 0.0
  %111 = vmatprep.subr.mxu0 0.0
  %112 = vmatpush2.msra.mxu0 0.0
  %113 = vmatprep.subr.mxu0 0.0
  %114 = vmatpush2.msra.mxu0 0.0
  %115 = vmatprep.subr.mxu0 0.0
  %116 = vmatpush2.msra.mxu0 0.0
  %117 = vmatprep.subr.mxu0 0.0
  %118 = vmatpush2.msra.mxu0 0.0
  %119 = vmatprep.subr.mxu0 0.0
  %120 = vmatpush2.msra.mxu0 0.0
  %121 = vmatprep.mubr.f32.mxu0 0.0
  %122 = vmatmul.mubr.f32.gmra.mxu0 %v46
  %v123 = vpop.f32.mrf.mxu0
  %v124 = vadd.f32 0.0, %v123
  %v125 = vpop.f32.mrf.mxu0
  %126 = vmatprep.mubr.f32.mxu0 0.0
  %127 = vmatmul.mubr.f32.gmra.mxu0 %v49
  %v128 = vpop.f32.mrf.mxu0
  %v129 = vadd.f32 0.0, %v128
  %v130 = vpop.f32.mrf.mxu0
  %131 = vmatprep.mubr.f32.mxu0 0.0
  %132 = vmatmul.mubr.f32.gmra.mxu0 %v52
  %v133 = vpop.f32.mrf.mxu0
  %v134 = vadd.f32 0.0, %v133
  %v135 = vpop.f32.mrf.mxu0
  %136 = vmatprep.mubr.f32.mxu0 0.0
  %137 = vmatmul.mubr.f32.gmra.mxu0 %v55
  %v138 = vpop.f32.mrf.mxu0
  %v139 = vadd.f32 0.0, %v138
  %v140 = vpop.f32.mrf.mxu0
  %141 = vdwg.mxu0
  %v142 = vadd.f32 %v124, %v129
  %v143 = vadd.f32 %v142, %v134
  %v144 = vadd.f32 %v143, %v139
  %v145 = vrot.slane %v144, 4
  %v146 = vadd.f32 %v144, %v145
  %v147 = vrot.slane %v146, 2
  %v148 = vadd.f32 %v146, %v147
  %v149 = vrot.slane %v148, 1
  %v150 = vadd.f32 %v148, %v149
  %v151 = vmul.f32 %v124, %v124
  %v152 = vmul.f32 %v129, %v129
  %v153 = vmul.f32 %v134, %v134
  %v154 = vmul.f32 %v139, %v139
  %v155 = vadd.f32 %v151, %v152
  %v156 = vadd.f32 %v155, %v153
  %v157 = vadd.f32 %v156, %v154
  %v158 = vrot.slane %v157, 4
  %v159 = vadd.f32 %v157, %v158
  %v160 = vrot.slane %v159, 2
  %v161 = vadd.f32 %v159, %v160
  %v162 = vrot.slane %v161, 1
  %v163 = vadd.f32 %v161, %v162
  %v164 = vld [vmem:[%s2] sm:$0x3]
  %vm165 = vcmask 1040384
  %v166 = vsel %vm165, %v150, %v163
  %v167 = vadd.f32 %v164, %v166
  %168 = vst [vmem:[%s2] sm:$0x3] %v167
  // Predicated region
  $region14: #{_mlp_forward_impl.2} parent=0 // pred_check
    _
  $region15: #{_mlp_forward_impl.2} parent=0 // pred_check_branch
    %170 = sbr.rel (0) target = $region17
  $region16: #{_mlp_forward_impl.2} parent=0 // pred_region
    _
  $region17: #{_mlp_forward_impl.2} parent=0 // pred_fallthru
    _
  // Predicated region
  $region18: #{_mlp_forward_impl.2} parent=0 // pred_check
    _
  $region19: #{_mlp_forward_impl.2} parent=0 // pred_check_branch
    %172 = sbr.rel (0) target = $region21
  $region20: #{_mlp_forward_impl.2} parent=0 // pred_region
    _
  $region21: #{_mlp_forward_impl.2} parent=0 // pred_fallthru
    _

// kernel: _mlp_forward_impl.3
$region0: #{_mlp_forward_impl.3}
  #allocation0 [shape = 'u32[]', space=smem, size = 0x4, offset = 0x4, fixed_abs, tag = 'smem constant byte address 0x4 - core index']
  #allocation1 [shape = 'u32[144,128]{1,0:T(1,128)}', space=vmem, size = 0x12000, scoped, tag = 'internal scratch']
  %s0 = inlined_call_operand.vmem [shape: f32[32,16], index: 0, kind: input, shape index: {}]
  %s1 = inlined_call_operand.vmem [shape: f32[16,128], index: 1, kind: input, shape index: {}]
  %s2 = inlined_call_operand.vmem [shape: f32[1,2,128], index: 2, kind: input, shape index: {}]
  %s3 = inlined_call_operand.vmem [shape: f32[1,128], index: 3, kind: input, shape index: {}]
  %s4 = inlined_call_operand.vmem [shape: f32[1,128], index: 4, kind: input, shape index: {}]
  %s5 = inlined_call_operand.hbm [shape: f32[128,128], index: 5, kind: input, shape index: {}]
  %s6 = inlined_call_operand.vmem [shape: f32[1,128], index: 6, kind: input, shape index: {}]
  %s7 = inlined_call_operand.vmem [shape: f32[32,128], index: 7, kind: output, shape index: {}]
  %s8 = sld [smem:[#allocation0]]
  $region42: #{_mlp_forward_impl.3} parent=0
    _
  %s10 = ssub.s32 1, %s8
  %s11 = scalar_select 0, %s10, %s8
  $region1: #{_mlp_forward_impl.3} parent=0
    #allocation2 [shape = 'u8[65536]{0}', space=vmem, size = 0x10000, scoped, tag = 'input window, operand 5, single buffered']
    #allocation3 [shape = 's32[1]{0}', space=sflag, size = 0x4, scoped, tag = 'scoped memory for _mlp_forward_impl.3']
    %12 = vsyncpa [#allocation3], 0
    // Predicated region
    $region2: #{_mlp_forward_impl.3} parent=1 // pred_check
      _
    $region3: #{_mlp_forward_impl.3} parent=1 // pred_check_branch
      %14 = sbr.rel (0) target = $region5
    $region4: #{_mlp_forward_impl.3} parent=1 // pred_region
      _
    $region5: #{_mlp_forward_impl.3} parent=1 // pred_fallthru
      _
    // Predicated region
    $region6: #{_mlp_forward_impl.3} parent=1 // pred_check
      _
    $region7: #{_mlp_forward_impl.3} parent=1 // pred_check_branch
      %16 = sbr.rel (0) target = $region9
    $region8: #{_mlp_forward_impl.3} parent=1 // pred_region
      _
    $region9: #{_mlp_forward_impl.3} parent=1 // pred_fallthru
      _
    // Predicated region
    $region10: #{_mlp_forward_impl.3} parent=1 // pred_check
      _
    $region11: #{_mlp_forward_impl.3} parent=1 // pred_check_branch
      %18 = sbr.rel (0) target = $region13
    $region12: #{_mlp_forward_impl.3} parent=1 // pred_region
      _
    $region13: #{_mlp_forward_impl.3} parent=1 // pred_fallthru
      _
    // Predicated region
    $region14: #{_mlp_forward_impl.3} parent=1 // pred_check
      _
    $region15: #{_mlp_forward_impl.3} parent=1 // pred_check_branch
      %20 = sbr.rel (0) target = $region17
    $region16: #{_mlp_forward_impl.3} parent=1 // pred_region
      _
    $region17: #{_mlp_forward_impl.3} parent=1 // pred_fallthru
      _
    // Predicated region
    $region18: #{_mlp_forward_impl.3} parent=1 // pred_check
      _
    $region19: #{_mlp_forward_impl.3} parent=1 // pred_check_branch
      %22 = sbr.rel (0) target = $region21
    $region20: #{_mlp_forward_impl.3} parent=1 // pred_region
      _
    $region21: #{_mlp_forward_impl.3} parent=1 // pred_fallthru
      _
    // Predicated region
    $region22: #{_mlp_forward_impl.3} parent=1 // pred_check
      _
    $region23: #{_mlp_forward_impl.3} parent=1 // pred_check_branch
      %24 = sbr.rel (0) target = $region25
    $region24: #{_mlp_forward_impl.3} parent=1 // pred_region
      %s26 = ssub.s32 2048, 2048
      %27 = vsyncadd [#allocation3], %s26
      %s28 = sshll.u32 [#allocation2], 4
      %s29 = int_to_ptr.vmem [resolvable:$true] %s28
      %34 = dma.hbm_to_vmem [thread:$0]  %s5, 2048, %s29, [#allocation3], 128, 128, 8
    $region25: #{_mlp_forward_impl.3} parent=1 // pred_fallthru
      _
    // Predicated region
    $region26: #{_mlp_forward_impl.3} parent=1 // pred_check
      _
    $region27: #{_mlp_forward_impl.3} parent=1 // pred_check_branch
      %36 = sbr.rel (0) target = $region29
    $region28: #{_mlp_forward_impl.3} parent=1 // pred_region
      _
    $region29: #{_mlp_forward_impl.3} parent=1 // pred_fallthru
      _
    // Predicated region
    $region30: #{_mlp_forward_impl.3} parent=1 // pred_check
      _
    $region31: #{_mlp_forward_impl.3} parent=1 // pred_check_branch
      %38 = sbr.rel (0) target = $region33
    $region32: #{_mlp_forward_impl.3} parent=1 // pred_region
      %39 = dma.done [#allocation3], 2048
    $region33: #{_mlp_forward_impl.3} parent=1 // pred_fallthru
      _
    %v40 = vld [vmem:[%s0] sm:$0xff]
    %v41 = vld [vmem:[%s0 + $0x8] sm:$0xff]
    %v42 = vld [vmem:[%s0 + $0x10] sm:$0xff]
    %v43 = vld [vmem:[%s0 + $0x18] sm:$0xff]
    %v44 = vld [vmem:[%s1] sm:$0xff]
    %v45 = vld [vmem:[%s1 + $0x8] sm:$0xff]
    %vm46 = vcmask 130048
    %v48 = vsel %vm46, %v40, 0
    %v51 = vsel %vm46, %v41, 0
    %v54 = vsel %vm46, %v42, 0
    %v57 = vsel %vm46, %v43, 0
    %59 = vmatprep.subr.mxu0 0.0
    %60 = vmatpush1.msra.mxu0 0.0
    %61 = vmatprep.subr.mxu0 0.0
    %62 = vmatpush1.msra.mxu0 0.0
    %63 = vmatprep.subr.mxu0 0.0
    %64 = vmatpush1.msra.mxu0 0.0
    %65 = vmatprep.subr.mxu0 0.0
    %66 = vmatpush1.msra.mxu0 0.0
    %67 = vmatprep.subr.mxu0 0.0
    %68 = vmatpush1.msra.mxu0 0.0
    %69 = vmatprep.subr.mxu0 0.0
    %70 = vmatpush1.msra.mxu0 0.0
    %71 = vmatprep.subr.mxu0 0.0
    %72 = vmatpush1.msra.mxu0 0.0
    %73 = vmatprep.subr.mxu0 0.0
    %74 = vmatpush1.msra.mxu0 0.0
    %75 = vmatprep.subr.mxu0 0.0
    %76 = vmatpush1.msra.mxu0 0.0
    %77 = vmatprep.subr.mxu0 0.0
    %78 = vmatpush1.msra.mxu0 0.0
    %79 = vmatprep.subr.mxu0 0.0
    %80 = vmatpush1.msra.mxu0 0.0
    %81 = vmatprep.subr.mxu0 0.0
    %82 = vmatpush1.msra.mxu0 0.0
    %83 = vmatprep.subr.mxu0 0.0
    %84 = vmatpush1.msra.mxu0 0.0
    %85 = vmatprep.subr.mxu0 0.0
    %86 = vmatpush1.msra.mxu0 0.0
    %87 = vmatprep.subr.mxu0 0.0
    %88 = vmatpush1.msra.mxu0 %v45
    %89 = vmatprep.subr.mxu0 0.0
    %90 = vmatpush1.msra.mxu0 %v44
    %91 = vmatprep.subr.mxu0 0.0
    %92 = vmatpush2.msra.mxu0 0.0
    %93 = vmatprep.subr.mxu0 0.0
    %94 = vmatpush2.msra.mxu0 0.0
    %95 = vmatprep.subr.mxu0 0.0
    %96 = vmatpush2.msra.mxu0 0.0
    %97 = vmatprep.subr.mxu0 0.0
    %98 = vmatpush2.msra.mxu0 0.0
    %99 = vmatprep.subr.mxu0 0.0
    %100 = vmatpush2.msra.mxu0 0.0
    %101 = vmatprep.subr.mxu0 0.0
    %102 = vmatpush2.msra.mxu0 0.0
    %103 = vmatprep.subr.mxu0 0.0
    %104 = vmatpush2.msra.mxu0 0.0
    %105 = vmatprep.subr.mxu0 0.0
    %106 = vmatpush2.msra.mxu0 0.0
    %107 = vmatprep.subr.mxu0 0.0
    %108 = vmatpush2.msra.mxu0 0.0
    %109 = vmatprep.subr.mxu0 0.0
    %110 = vmatpush2.msra.mxu0 0.0
    %111 = vmatprep.subr.mxu0 0.0
    %112 = vmatpush2.msra.mxu0 0.0
    %113 = vmatprep.subr.mxu0 0.0
    %114 = vmatpush2.msra.mxu0 0.0
    %115 = vmatprep.subr.mxu0 0.0
    %116 = vmatpush2.msra.mxu0 0.0
    %117 = vmatprep.subr.mxu0 0.0
    %118 = vmatpush2.msra.mxu0 0.0
    %119 = vmatprep.subr.mxu0 0.0
    %120 = vmatpush2.msra.mxu0 0.0
    %121 = vmatprep.subr.mxu0 0.0
    %122 = vmatpush2.msra.mxu0 0.0
    %123 = vmatprep.mubr.f32.mxu0 0.0
    %124 = vmatmul.mubr.f32.gmra.mxu0 %v48
    %v125 = vpop.f32.mrf.mxu0
    %v126 = vadd.f32 0.0, %v125
    %v127 = vpop.f32.mrf.mxu0
    %128 = vmatprep.mubr.f32.mxu0 0.0
    %129 = vmatmul.mubr.f32.gmra.mxu0 %v51
    %v130 = vpop.f32.mrf.mxu0
    %v131 = vadd.f32 0.0, %v130
    %v132 = vpop.f32.mrf.mxu0
    %133 = vmatprep.mubr.f32.mxu0 0.0
    %134 = vmatmul.mubr.f32.gmra.mxu0 %v54
    %v135 = vpop.f32.mrf.mxu0
    %v136 = vadd.f32 0.0, %v135
    %v137 = vpop.f32.mrf.mxu0
    %138 = vmatprep.mubr.f32.mxu0 0.0
    %139 = vmatmul.mubr.f32.gmra.mxu0 %v57
    %v140 = vpop.f32.mrf.mxu0
    %v141 = vadd.f32 0.0, %v140
    %v142 = vpop.f32.mrf.mxu0
    %143 = vdwg.mxu0
    %v144 = vld [vmem:[%s2] sm:$0x3]
    %v145 = vadd.f32 %v144, 0.0
    %v146 = vmul.f32 %v145, 0.03125
    %v147 = vmul.f32 %v146, %v146
    %v149 = vrot.slane %v147, 7
    %v151 = vsub.f32 %v146, %v149
    %v152 = vmax.f32 %v151, 0.0
    %v153 = vld [vmem:[%s3] sm:$0x1]
    %v154 = vadd.f32 %v152, 1e-05
    %v155 = vrsqrt.pop %v154
    %v158 = vunpack.c.l.s4 1966171168
    %v159 = vunpack.c.0.s8 %v158
    %v160 = vlaneseq
    %v161 = vshrl.u32 %v160, 7
    %v162 = vsub.s32 %v159, %v161
    %v163 = vrot.slane %v155, %v162
    %v164 = vcombine.high %v163, %v163
    %v166 = vunpack.c.l.s4 1966171168
    %v167 = vunpack.c.0.s8 %v166
    %v168 = vlaneseq
    %v169 = vshrl.u32 %v168, 7
    %v170 = vsub.s32 %v167, %v169
    %v171 = vrot.slane %v164, %v170
    %v173 = vmul.f32 %v153, %v171
    %v174 = vld [vmem:[%s4] sm:$0x1]
    %v175 = vmul.f32 %v146, %v173
    %v176 = vsub.f32 %v174, %v175
    %v178 = vlaneseq
    %v179 = vshrl.u32 %v178, 7
    %v180 = vsub.s32 0, %v179
    %v181 = vrot.slane %v173, %v180
    %v183 = vmul.f32 %v126, %v181
    %v184 = vmul.f32 %v131, %v181
    %v185 = vmul.f32 %v136, %v181
    %v186 = vmul.f32 %v141, %v181
    %v188 = vlaneseq
    %v189 = vshrl.u32 %v188, 7
    %v190 = vsub.s32 0, %v189
    %v191 = vrot.slane %v176, %v190
    %v193 = vadd.f32 %v183, %v191
    %v194 = vadd.f32 %v184, %v191
    %v195 = vadd.f32 %v185, %v191
    %v196 = vadd.f32 %v186, %v191
    %v197 = vmax.f32 %v193, 0.0
    %v198 = vmax.f32 %v194, 0.0
    %v199 = vmax.f32 %v195, 0.0
    %v200 = vmax.f32 %v196, 0.0
    %v201 = vld [vmem:[#allocation2] sm:$0xff]
    %v202 = vld [vmem:[#allocation2 + $0x8] sm:$0xff]
    %v203 = vld [vmem:[#allocation2 + $0x10] sm:$0xff]
    %v204 = vld [vmem:[#allocation2 + $0x18] sm:$0xff]
    %v205 = vld [vmem:[#allocation2 + $0x20] sm:$0xff]
    %v206 = vld [vmem:[#allocation2 + $0x28] sm:$0xff]
    %v207 = vld [vmem:[#allocation2 + $0x30] sm:$0xff]
    %v208 = vld [vmem:[#allocation2 + $0x38] sm:$0xff]
    %v209 = vld [vmem:[#allocation2 + $0x40] sm:$0xff]
    %v210 = vld [vmem:[#allocation2 + $0x48] sm:$0xff]
    %v211 = vld [vmem:[#allocation2 + $0x50] sm:$0xff]
    %v212 = vld [vmem:[#allocation2 + $0x58] sm:$0xff]
    %v213 = vld [vmem:[#allocation2 + $0x60] sm:$0xff]
    %v214 = vld [vmem:[#allocation2 + $0x68] sm:$0xff]
    %v215 = vld [vmem:[#allocation2 + $0x70] sm:$0xff]
    %v216 = vld [vmem:[#allocation2 + $0x78] sm:$0xff]
    %v217 = vld [vmem:[%s6] sm:$0x1]
    %v219 = vlaneseq
    %v220 = vshrl.u32 %v219, 7
    %v221 = vsub.s32 0, %v220
    %v222 = vrot.slane %v217, %v221
    %224 = vmatprep.subr.mxu0 0.0
    %225 = vmatpush1.msra.mxu0 %v216
    %226 = vmatprep.subr.mxu0 0.0
    %227 = vmatpush1.msra.mxu0 %v215
    %228 = vmatprep.subr.mxu0 0.0
    %229 = vmatpush1.msra.mxu0 %v214
    %230 = vmatprep.subr.mxu0 0.0
    %231 = vmatpush1.msra.mxu0 %v213
    %232 = vmatprep.subr.mxu0 0.0
    %233 = vmatpush1.msra.mxu0 %v212
    %234 = vmatprep.subr.mxu0 0.0
    %235 = vmatpush1.msra.mxu0 %v211
    %236 = vmatprep.subr.mxu0 0.0
    %237 = vmatpush1.msra.mxu0 %v210
    %238 = vmatprep.subr.mxu0 0.0
    %239 = vmatpush1.msra.mxu0 %v209
    %240 = vmatprep.subr.mxu0 0.0
    %241 = vmatpush1.msra.mxu0 %v208
    %242 = vmatprep.subr.mxu0 0.0
    %243 = vmatpush1.msra.mxu0 %v207
    %244 = vmatprep.subr.mxu0 0.0
    %245 = vmatpush1.msra.mxu0 %v206
    %246 = vmatprep.subr.mxu0 0.0
    %247 = vmatpush1.msra.mxu0 %v205
    %248 = vmatprep.subr.mxu0 0.0
    %249 = vmatpush1.msra.mxu0 %v204
    %250 = vmatprep.subr.mxu0 0.0
    %251 = vmatpush1.msra.mxu0 %v203
    %252 = vmatprep.subr.mxu0 0.0
    %253 = vmatpush1.msra.mxu0 %v202
    %254 = vmatprep.subr.mxu0 0.0
    %255 = vmatpush1.msra.mxu0 %v201
    %256 = vmatprep.subr.mxu0 0.0
    %257 = vmatpush2.msra.mxu0 0.0
    %258 = vmatprep.subr.mxu0 0.0
    %259 = vmatpush2.msra.mxu0 0.0
    %260 = vmatprep.subr.mxu0 0.0
    %261 = vmatpush2.msra.mxu0 0.0
    %262 = vmatprep.subr.mxu0 0.0
    %263 = vmatpush2.msra.mxu0 0.0
    %264 = vmatprep.subr.mxu0 0.0
    %265 = vmatpush2.msra.mxu0 0.0
    %266 = vmatprep.subr.mxu0 0.0
    %267 = vmatpush2.msra.mxu0 0.0
    %268 = vmatprep.subr.mxu0 0.0
    %269 = vmatpush2.msra.mxu0 0.0
    %270 = vmatprep.subr.mxu0 0.0
    %271 = vmatpush2.msra.mxu0 0.0
    %272 = vmatprep.subr.mxu0 0.0
    %273 = vmatpush2.msra.mxu0 0.0
    %274 = vmatprep.subr.mxu0 0.0
    %275 = vmatpush2.msra.mxu0 0.0
    %276 = vmatprep.subr.mxu0 0.0
    %277 = vmatpush2.msra.mxu0 0.0
    %278 = vmatprep.subr.mxu0 0.0
    %279 = vmatpush2.msra.mxu0 0.0
    %280 = vmatprep.subr.mxu0 0.0
    %281 = vmatpush2.msra.mxu0 0.0
    %282 = vmatprep.subr.mxu0 0.0
    %283 = vmatpush2.msra.mxu0 0.0
    %284 = vmatprep.subr.mxu0 0.0
    %285 = vmatpush2.msra.mxu0 0.0
    %286 = vmatprep.subr.mxu0 0.0
    %287 = vmatpush2.msra.mxu0 0.0
    %288 = vmatprep.mubr.f32.mxu0 0.0
    %289 = vmatmul.mubr.f32.gmra.mxu0 %v197
    %v290 = vpop.f32.mrf.mxu0
    %v291 = vadd.f32 %v222, %v290
    %v292 = vpop.f32.mrf.mxu0
    %293 = vmatprep.mubr.f32.mxu0 0.0
    %294 = vmatmul.mubr.f32.gmra.mxu0 %v198
    %v295 = vpop.f32.mrf.mxu0
    %v296 = vadd.f32 %v222, %v295
    %v297 = vpop.f32.mrf.mxu0
    %298 = vmatprep.mubr.f32.mxu0 0.0
    %299 = vmatmul.mubr.f32.gmra.mxu0 %v199
    %v300 = vpop.f32.mrf.mxu0
    %v301 = vadd.f32 %v222, %v300
    %v302 = vpop.f32.mrf.mxu0
    %303 = vmatprep.mubr.f32.mxu0 0.0
    %304 = vmatmul.mubr.f32.gmra.mxu0 %v200
    %v305 = vpop.f32.mrf.mxu0
    %v306 = vadd.f32 %v222, %v305
    %v307 = vpop.f32.mrf.mxu0
    %308 = vdwg.mxu0
    %309 = vst [vmem:[%s7] sm:$0xff] %v291
    %310 = vst [vmem:[%s7 + $0x8] sm:$0xff] %v296
    %311 = vst [vmem:[%s7 + $0x10] sm:$0xff] %v301
    %312 = vst [vmem:[%s7 + $0x18] sm:$0xff] %v306
    // Predicated region
    $region34: #{_mlp_forward_impl.3} parent=1 // pred_check
      _
    $region35: #{_mlp_forward_impl.3} parent=1 // pred_check_branch
      %314 = sbr.rel (0) target = $region37
    $region36: #{_mlp_forward_impl.3} parent=1 // pred_region
      _
    $region37: #{_mlp_forward_impl.3} parent=1 // pred_fallthru
      _
    // Predicated region
    $region38: #{_mlp_forward_impl.3} parent=1 // pred_check
      _
    $region39: #{_mlp_forward_impl.3} parent=1 // pred_check_branch
      %316 = sbr.rel (0) target = $region41
    $region40: #{_mlp_forward_impl.3} parent=1 // pred_region
      _
    $region41: #{_mlp_forward_impl.3} parent=1 // pred_fallthru
      _
    %317 = vsyncpa [#allocation3], 1

</llo_original>
